<compile_context>
chip_gen: v7x
topology: tpu7x:2x2x1
jax: 0.10.0
libtpu: 0.0.40
codegen_flags: <defaults>
</compile_context>

<pallas_src>
import numpy as np
import jax
import jax.numpy as jnp
from jax.experimental import pallas as pl
from jax.experimental.pallas import tpu as pltpu


# ----------------------------- fused Pallas kernel ---------------------------

def _make_fused_kernel(geom, b_tile, num_blocks):
    """Whole forward for B_TILE images (row-stacked) per grid step.

    Ref order: x, [w, b, ce, co]*nblk, wd, bd, out, [y_scr, p_scr]*nblk.
    geom[bi] static ints:
      m      rows of the merged-K conv LHS / conv output (rows_in - 2)
      re     rows of the pooled output ((b_tile-1)*s_out + hp)
      s_out  per-image row stride of the pooled output
      hp     valid pooled rows per image
    """

    def kernel(*refs):
        x_ref = refs[0]
        w_refs = refs[1:1 + 4 * num_blocks]
        wd_ref = refs[1 + 4 * num_blocks]
        bd_ref = refs[2 + 4 * num_blocks]
        out_ref = refs[3 + 4 * num_blocks]
        scr = refs[4 + 4 * num_blocks:]

        cur_ref = x_ref                       # (b_tile*stride_in, W*C) rows
        for bi in range(num_blocks):
            g = geom[bi]
            w_ref, b_ref, ce_ref, co_ref = w_refs[4 * bi:4 * bi + 4]
            y_ref, p_ref = scr[2 * bi], scr[2 * bi + 1]
            m = g['m']

            # 3x3 valid conv as ONE bf16 MXU matmul: lane-concat of the 3
            # row-shifted views (K = 3*W*Cin) x merged Toeplitz weight with the
            # eval-mode BN scale folded in; BN bias + ReLU on the VPU (f32).
            lhs = jnp.concatenate(
                [cur_ref[pl.ds(k, m), :] for k in range(3)], axis=-1
            ).astype(jnp.bfloat16)
            y = jnp.dot(lhs, w_ref[...], preferred_element_type=jnp.float32)
            y = jnp.maximum(y + b_ref[...], 0.0)       # (m, Wo*Cout) f32
            # Dropout(p=0.3): identity in eval mode.

            # fused MaxPool2d(2): row pairs via strided VMEM loads + VPU max
            # (exact, off the MXU); column pairs via 2 selection matmuls on the
            # shared row max (max commutes with the 0/1 column selection).
            y_ref[...] = y
            row_max = jnp.maximum(y_ref[pl.ds(0, g['re'], stride=2), :],
                                  y_ref[pl.ds(1, g['re'], stride=2), :])
            rm = row_max.astype(jnp.bfloat16)
            p_ref[...] = jnp.maximum(
                jnp.dot(rm, ce_ref[...], preferred_element_type=jnp.float32),
                jnp.dot(rm, co_ref[...], preferred_element_type=jnp.float32))
            cur_ref = p_ref                   # per-image stride halves

        # flatten (NCHW order) + dense1 + dense2: ONE matmul against the folded
        # (Hp*Wp*C, 5) weight; each image's Hp pooled rows gathered with
        # strided reads and lane-concatenated (M = b_tile).
        g = geom[-1]
        parts = []
        for r in range(g['hp']):
            if b_tile == 1:
                parts.append(cur_ref[pl.ds(r, 1), :])
            else:
                parts.append(cur_ref[pl.ds(r, b_tile, stride=g['s_out']), :])
        lhs = jnp.concatenate(parts, axis=-1) if len(parts) > 1 else parts[0]
        logits = jnp.dot(lhs.astype(jnp.bfloat16), wd_ref[...],
                         preferred_element_type=jnp.float32) + bd_ref[...]
        out_ref[0] = logits.astype(out_ref.dtype)

    return kernel


def _resident_spec(shape):
    # Full-array block, constant index map -> stays VMEM-resident across steps.
    nd = len(shape)
    return pl.BlockSpec(tuple(shape), lambda i: (0,) * nd)


def _pick_b_tile(n, target=8):
    """Largest divisor of n that is <= target, preferring to keep >= 2 grid
    steps so both v7x TensorCores get work.  target=8 gives ~128 stacked MXU
    rows for 16x16 inputs (use ~16 on v7x to target M~=256)."""
    cands = [d for d in range(1, n + 1) if n % d == 0 and d <= target]
    multi = [d for d in cands if n // d >= 2]
    return max(multi) if multi else max(cands)


def penta_classifier_forward(x_nchw, params, b_tile=None, b_tile_target=8):
    n, c, h, w = x_nchw.shape
    # NCHW -> stacked "(rows, lanes) = (N*H, W*C)" layout (one XLA transpose).
    # TODO(synk): accept NHWC upstream to avoid this extra HBM pass at scale.
    x2d = jnp.transpose(x_nchw, (0, 2, 3, 1)).reshape(n * h, w * c)

    blocks = params['blocks']
    nblk = len(blocks)
    if b_tile is None:
        b_tile = _pick_b_tile(n, b_tile_target)
    assert n % b_tile == 0
    # Stacked-row pooling needs the per-image row stride to stay even.
    assert h % (2 ** nblk) == 0, "H must be divisible by 2**num_conv_blocks"
    # TODO(synk): fall back to per-image row selection when that fails.

    # Static per-grid-step geometry + per-block VMEM scratch (pre-pool, pooled).
    geom, scratch = [], []
    h_in, w_in, s_in, rows_in = h, w, h, b_tile * h
    for blk in blocks:
        c_out = blk['c_out']
        ho, wo = h_in - 2, w_in - 2
        hp, wp = ho // 2, wo // 2
        m = rows_in - 2
        s_out = s_in // 2
        re = (b_tile - 1) * s_out + hp
        geom.append(dict(m=m, re=re, s_out=s_out, hp=hp))
        scratch.append(pltpu.VMEM((m, wo * c_out), jnp.float32))
        scratch.append(pltpu.VMEM((re, wp * c_out), jnp.float32))
        h_in, w_in, s_in, rows_in = hp, wp, s_out, re

    operands = [x2d]
    in_specs = [pl.BlockSpec((b_tile * h, w * c), lambda i: (i, 0))]
    for blk in blocks:
        for name in ('w', 'b', 'ce', 'co'):
            arr = blk[name]
            operands.append(arr)
            in_specs.append(_resident_spec(arr.shape))
    for name in ('wd', 'bd'):
        arr = params[name]
        operands.append(arr)
        in_specs.append(_resident_spec(arr.shape))

    n_out = params['bd'].shape[-1]
    out = pl.pallas_call(
        _make_fused_kernel(geom, b_tile, nblk),
        out_shape=jax.ShapeDtypeStruct((n // b_tile, b_tile, n_out), jnp.float32),
        grid=(n // b_tile,),
        in_specs=in_specs,
        out_specs=pl.BlockSpec((1, b_tile, n_out), lambda i: (i, 0, 0)),
        scratch_shapes=scratch,
        compiler_params=pltpu.CompilerParams(
            dimension_semantics=("parallel",)),   # v7x: shard batch over 2 TCs
    )(*operands)
    return out.reshape(n, n_out)


# ----------------------------- parameters ------------------------------------

def init_params(cfg, key, image_hw):
    """Kernel-ready (folded, bf16 MXU operands) params + raw params for the
    pure-jnp reference."""
    nblk = cfg['num_conv_blocks']
    keys = jax.random.split(key, nblk + 4)
    eps = 1e-5

    blocks, raw_blocks = [], []
    h_in, w_in = image_hw
    c_in = cfg['in_channels']
    for i in range(nblk):
        cin = c_in if i == 0 else cfg['channels'][i][0]
        cout = cfg['channels'][i][1]
        # Conv2d(cin, cout, 3, bias=False) weight (Cout, Cin, 3, 3)
        wconv = jax.random.normal(keys[i], (cout, cin, 3, 3), jnp.float32) * 0.1
        # BatchNorm2d fresh-init running stats, eval mode -> per-channel affine
        gamma = np.ones(cout, np.float32)
        beta = np.zeros(cout, np.float32)
        rmean = np.zeros(cout, np.float32)
        rvar = np.ones(cout, np.float32)
        scale = gamma / np.sqrt(rvar + eps)
        bias = beta - rmean * scale

        ho, wo = h_in - 2, w_in - 2
        hp, wp = ho // 2, wo // 2          # MaxPool2d(2) floors

        # Merged Toeplitz conv weight (3*W_in*Cin, Wo*Cout), ky-major along K,
        # matching the in-kernel lane-concat of the 3 row-shifted views.
        w_np = np.asarray(wconv)
        wt = np.zeros((3, w_in * cin, wo * cout), np.float32)
        for ky in range(3):
            for j in range(wo):
                for kx in range(3):
                    wt[ky, (j + kx) * cin:(j + kx + 1) * cin,
                       j * cout:(j + 1) * cout] = (w_np[:, :, ky, kx] * scale[:, None]).T
        wt_merged = wt.reshape(3 * w_in * cin, wo * cout)
        b_tiled = np.tile(bias, wo).reshape(1, wo * cout)

        # Exact 0/1 column-selection matrices for the fused 2x2 max-pool
        # (row selection is done with strided VMEM reads in the kernel).
        col_e = np.zeros((wo * cout, wp * cout), np.float32)
        col_o = np.zeros((wo * cout, wp * cout), np.float32)
        for jp in range(wp):
            for ch in range(cout):
                col_e[(2 * jp) * cout + ch, jp * cout + ch] = 1.0
                col_o[(2 * jp + 1) * cout + ch, jp * cout + ch] = 1.0

        blocks.append(dict(w=jnp.asarray(wt_merged, jnp.bfloat16),
                           b=jnp.asarray(b_tiled),
                           ce=jnp.asarray(col_e, jnp.bfloat16),
                           co=jnp.asarray(col_o, jnp.bfloat16),
                           c_out=cout))
        raw_blocks.append(dict(w=wconv, scale=jnp.asarray(scale),
                               bias=jnp.asarray(bias)))
        h_in, w_in, c_in = hp, wp, cout

    feats = cfg['base_in_features']
    assert feats == c_in * h_in * w_in, (feats, c_in, h_in, w_in)
    # dense1: Linear(feats, 10); dense2: Linear(10, 5)
    d1_w = jax.random.normal(keys[nblk + 0], (10, feats), jnp.float32) * 0.1
    d1_b = jax.random.normal(keys[nblk + 1], (10,), jnp.float32) * 0.01
    d2_w = jax.random.normal(keys[nblk + 2], (5, 10), jnp.float32) * 0.1
    d2_b = jax.random.normal(keys[nblk + 3], (5,), jnp.float32) * 0.01

    # Collapse dense2(dense1(x)) into one (feats, 5) matmul (no nonlinearity
    # between the Linears) and fold the NCHW flatten permutation into it,
    # ordered as the kernel's lane-concat: K index = r*(Wp*C) + jp*C + ch.
    wc_mat = np.asarray(d1_w).T @ np.asarray(d2_w).T                # (feats, 5)
    bc = np.asarray(d1_b) @ np.asarray(d2_w).T + np.asarray(d2_b)   # (5,)
    hp_f, wp_f, c_f = h_in, w_in, c_in
    wd = np.zeros((hp_f * wp_f * c_f, 5), np.float32)
    for r in range(hp_f):
        for jp in range(wp_f):
            for ch in range(c_f):
                wd[r * wp_f * c_f + jp * c_f + ch, :] = \
                    wc_mat[ch * hp_f * wp_f + r * wp_f + jp, :]

    params = dict(blocks=blocks, wd=jnp.asarray(wd, jnp.bfloat16),
                  bd=jnp.asarray(bc.reshape(1, 5)))
    ref_params = dict(blocks=raw_blocks, d1_w=d1_w, d1_b=d1_b,
                      d2_w=d2_w, d2_b=d2_b)
    return params, ref_params


# ----------------------------- pure-jnp reference ----------------------------

def penta_classifier_reference(x_nchw, ref_params):
    """PyTorch-semantics forward (conv -> BN(eval) -> ReLU -> pool, NCHW flatten,
    dense1, dense2) in f32-HIGHEST, for a correctness check."""
    hi = jax.lax.Precision.HIGHEST
    x = x_nchw
    for blk in ref_params['blocks']:
        x = jax.lax.conv_general_dilated(
            x, blk['w'], window_strides=(1, 1), padding='VALID',
            dimension_numbers=('NCHW', 'OIHW', 'NCHW'), precision=hi)
        x = x * blk['scale'][None, :, None, None] + blk['bias'][None, :, None, None]
        x = jnp.maximum(x, 0.0)
        nb, cc, hh, ww = x.shape
        hp, wp = hh // 2, ww // 2
        x = x[:, :, :hp * 2, :wp * 2].reshape(nb, cc, hp, 2, wp, 2).max(axis=(3, 5))
    x = x.reshape(x.shape[0], -1)
    hmid = jnp.dot(x, ref_params['d1_w'].T, precision=hi) + ref_params['d1_b']
    return jnp.dot(hmid, ref_params['d2_w'].T, precision=hi) + ref_params['d2_b']


# ----------------------------- main -------------------------------------------

if __name__ == "__main__":
    cfg = {
        'num_conv_blocks': 2,
        'in_channels': 4,
        'channels': [[4, 8], [8, 16]],
        # 16x16 input: conv3->14, pool->7, conv3->5, pool->2 => 16*2*2 = 64
        'base_in_features': 64,
    }
    key = jax.random.PRNGKey(0)
    kx, kp = jax.random.split(key)
    x = jax.random.normal(kx, (2, cfg['in_channels'], 16, 16), jnp.float32)  # NCHW

    params, ref_params = init_params(cfg, kp, image_hw=(16, 16))

    fwd = jax.jit(lambda a: penta_classifier_forward(a, params))
    out = jax.block_until_ready(fwd(x))
    assert out.shape == (2, 5), out.shape

    # Kernel matmuls run single-pass bf16 on the MXU (per the perf review);
    # compare against the f32-HIGHEST reference at a bf16-level tolerance.
    ref = penta_classifier_reference(x, ref_params)
    assert jnp.allclose(out, ref, rtol=2e-2, atol=2e-2), "mismatch vs jnp reference"

    print("KERNEL_OK")
</pallas_src>

<mosaic_0001>
module attributes {stable_mosaic.version = 11 : i64} {
  func.func @kernel(%arg0: i32, %arg1: memref<16x64xf32, #tpu.memory_space<vmem>>, %arg2: memref<192x112xbf16, #tpu.memory_space<vmem>>, %arg3: memref<1x112xf32, #tpu.memory_space<vmem>>, %arg4: memref<112x56xbf16, #tpu.memory_space<vmem>>, %arg5: memref<112x56xbf16, #tpu.memory_space<vmem>>, %arg6: memref<168x80xbf16, #tpu.memory_space<vmem>>, %arg7: memref<1x80xf32, #tpu.memory_space<vmem>>, %arg8: memref<80x32xbf16, #tpu.memory_space<vmem>>, %arg9: memref<80x32xbf16, #tpu.memory_space<vmem>>, %arg10: memref<64x5xbf16, #tpu.memory_space<vmem>>, %arg11: memref<1x5xf32, #tpu.memory_space<vmem>>, %arg12: memref<1x1x5xf32, #tpu.memory_space<vmem>>, %arg13: memref<14x112xf32, #tpu.memory_space<vmem>>, %arg14: memref<7x56xf32, #tpu.memory_space<vmem>>, %arg15: memref<5x80xf32, #tpu.memory_space<vmem>>, %arg16: memref<2x32xf32, #tpu.memory_space<vmem>>) attributes {dimension_semantics = [#tpu.dimension_semantics<parallel>], iteration_bounds = array<i64: 2>, scalar_prefetch = 0 : i64, scratch_operands = 4 : i64, tpu.core_type = #tpu.core_type<tc>, window_params = [{transform_indices = @transform_0, window_bounds = array<i64: 16, 64>}, {pipeline_mode = #tpu.pipeline_mode<synchronous>, transform_indices = @transform_1, window_bounds = array<i64: 192, 112>}, {pipeline_mode = #tpu.pipeline_mode<synchronous>, transform_indices = @transform_2, window_bounds = array<i64: 1, 112>}, {pipeline_mode = #tpu.pipeline_mode<synchronous>, transform_indices = @transform_3, window_bounds = array<i64: 112, 56>}, {pipeline_mode = #tpu.pipeline_mode<synchronous>, transform_indices = @transform_4, window_bounds = array<i64: 112, 56>}, {pipeline_mode = #tpu.pipeline_mode<synchronous>, transform_indices = @transform_5, window_bounds = array<i64: 168, 80>}, {pipeline_mode = #tpu.pipeline_mode<synchronous>, transform_indices = @transform_6, window_bounds = array<i64: 1, 80>}, {pipeline_mode = #tpu.pipeline_mode<synchronous>, transform_indices = @transform_7, window_bounds = array<i64: 80, 32>}, {pipeline_mode = #tpu.pipeline_mode<synchronous>, transform_indices = @transform_8, window_bounds = array<i64: 80, 32>}, {pipeline_mode = #tpu.pipeline_mode<synchronous>, transform_indices = @transform_9, window_bounds = array<i64: 64, 5>}, {pipeline_mode = #tpu.pipeline_mode<synchronous>, transform_indices = @transform_10, window_bounds = array<i64: 1, 5>}, {transform_indices = @transform_11, window_bounds = array<i64: 1, 1, 5>}]} {
    %c0 = arith.constant 0 : index
    %c0_0 = arith.constant 0 : index
    %0 = vector.load %arg1[%c0, %c0_0] : memref<16x64xf32, #tpu.memory_space<vmem>>, vector<14x64xf32>
    %c1 = arith.constant 1 : index
    %c0_1 = arith.constant 0 : index
    %1 = vector.load %arg1[%c1, %c0_1] : memref<16x64xf32, #tpu.memory_space<vmem>>, vector<14x64xf32>
    %c2 = arith.constant 2 : index
    %c0_2 = arith.constant 0 : index
    %2 = vector.load %arg1[%c2, %c0_2] : memref<16x64xf32, #tpu.memory_space<vmem>>, vector<14x64xf32>
    %3 = tpu.concatenate %0, %1, %2 in 1 : vector<14x64xf32>, vector<14x64xf32>, vector<14x64xf32> -> vector<14x192xf32>
    %4 = arith.truncf %3 : vector<14x192xf32> to vector<14x192xbf16>
    %c0_3 = arith.constant 0 : index
    %c0_4 = arith.constant 0 : index
    %5 = vector.load %arg2[%c0_3, %c0_4] : memref<192x112xbf16, #tpu.memory_space<vmem>>, vector<192x112xbf16>
    %cst = arith.constant dense<0.000000e+00> : vector<14x112xf32>
    %6 = tpu.matmul %4, %5, %cst {dimension_numbers = #tpu.dot_dimension_numbers<[1], [0], [0], [1], [0, 0, 1, 1], [], []>} : vector<14x192xbf16>, vector<192x112xbf16>, vector<14x112xf32> -> vector<14x112xf32>
    %c0_5 = arith.constant 0 : index
    %c0_6 = arith.constant 0 : index
    %7 = vector.load %arg3[%c0_5, %c0_6] : memref<1x112xf32, #tpu.memory_space<vmem>>, vector<1x112xf32>
    %8 = vector.broadcast %7 : vector<1x112xf32> to vector<14x112xf32>
    %9 = arith.addf %6, %8 : vector<14x112xf32>
    %cst_7 = arith.constant 0.000000e+00 : f32
    %10 = vector.broadcast %cst_7 : f32 to vector<14x112xf32>
    %11 = arith.maximumf %9, %10 : vector<14x112xf32>
    %c0_8 = arith.constant 0 : index
    %c0_9 = arith.constant 0 : index
    %12 = vector.load %arg13[%c0_8, %c0_9] : memref<14x112xf32, #tpu.memory_space<vmem>>, vector<14x112xf32>
    tpu.vector_store %arg13[%c0_8, %c0_9], %11 {strides = array<i32>} : memref<14x112xf32, #tpu.memory_space<vmem>>, vector<14x112xf32>,
    %c0_10 = arith.constant 0 : index
    %c0_11 = arith.constant 0 : index
    %13 = tpu.strided_load %arg13[%c0_10, %c0_11] {strides = array<i32: 2, 1>} : memref<14x112xf32, #tpu.memory_space<vmem>>, vector<7x112xf32>
    %c1_12 = arith.constant 1 : index
    %c0_13 = arith.constant 0 : index
    %14 = tpu.strided_load %arg13[%c1_12, %c0_13] {strides = array<i32: 2, 1>} : memref<14x112xf32, #tpu.memory_space<vmem>>, vector<7x112xf32>
    %15 = arith.maximumf %13, %14 : vector<7x112xf32>
    %16 = arith.truncf %15 : vector<7x112xf32> to vector<7x112xbf16>
    %c0_14 = arith.constant 0 : index
    %c0_15 = arith.constant 0 : index
    %17 = vector.load %arg4[%c0_14, %c0_15] : memref<112x56xbf16, #tpu.memory_space<vmem>>, vector<112x56xbf16>
    %cst_16 = arith.constant dense<0.000000e+00> : vector<7x56xf32>
    %18 = tpu.matmul %16, %17, %cst_16 {dimension_numbers = #tpu.dot_dimension_numbers<[1], [0], [0], [1], [0, 0, 1, 1], [], []>} : vector<7x112xbf16>, vector<112x56xbf16>, vector<7x56xf32> -> vector<7x56xf32>
    %c0_17 = arith.constant 0 : index
    %c0_18 = arith.constant 0 : index
    %19 = vector.load %arg5[%c0_17, %c0_18] : memref<112x56xbf16, #tpu.memory_space<vmem>>, vector<112x56xbf16>
    %cst_19 = arith.constant dense<0.000000e+00> : vector<7x56xf32>
    %20 = tpu.matmul %16, %19, %cst_19 {dimension_numbers = #tpu.dot_dimension_numbers<[1], [0], [0], [1], [0, 0, 1, 1], [], []>} : vector<7x112xbf16>, vector<112x56xbf16>, vector<7x56xf32> -> vector<7x56xf32>
    %21 = arith.maximumf %18, %20 : vector<7x56xf32>
    %c0_20 = arith.constant 0 : index
    %c0_21 = arith.constant 0 : index
    %22 = vector.load %arg14[%c0_20, %c0_21] : memref<7x56xf32, #tpu.memory_space<vmem>>, vector<7x56xf32>
    tpu.vector_store %arg14[%c0_20, %c0_21], %21 {strides = array<i32>} : memref<7x56xf32, #tpu.memory_space<vmem>>, vector<7x56xf32>,
    %c0_22 = arith.constant 0 : index
    %c0_23 = arith.constant 0 : index
    %23 = vector.load %arg14[%c0_22, %c0_23] : memref<7x56xf32, #tpu.memory_space<vmem>>, vector<5x56xf32>
    %c1_24 = arith.constant 1 : index
    %c0_25 = arith.constant 0 : index
    %24 = vector.load %arg14[%c1_24, %c0_25] : memref<7x56xf32, #tpu.memory_space<vmem>>, vector<5x56xf32>
    %c2_26 = arith.constant 2 : index
    %c0_27 = arith.constant 0 : index
    %25 = vector.load %arg14[%c2_26, %c0_27] : memref<7x56xf32, #tpu.memory_space<vmem>>, vector<5x56xf32>
    %26 = tpu.concatenate %23, %24, %25 in 1 : vector<5x56xf32>, vector<5x56xf32>, vector<5x56xf32> -> vector<5x168xf32>
    %27 = arith.truncf %26 : vector<5x168xf32> to vector<5x168xbf16>
    %c0_28 = arith.constant 0 : index
    %c0_29 = arith.constant 0 : index
    %28 = vector.load %arg6[%c0_28, %c0_29] : memref<168x80xbf16, #tpu.memory_space<vmem>>, vector<168x80xbf16>
    %cst_30 = arith.constant dense<0.000000e+00> : vector<5x80xf32>
    %29 = tpu.matmul %27, %28, %cst_30 {dimension_numbers = #tpu.dot_dimension_numbers<[1], [0], [0], [1], [0, 0, 1, 1], [], []>} : vector<5x168xbf16>, vector<168x80xbf16>, vector<5x80xf32> -> vector<5x80xf32>
    %c0_31 = arith.constant 0 : index
    %c0_32 = arith.constant 0 : index
    %30 = vector.load %arg7[%c0_31, %c0_32] : memref<1x80xf32, #tpu.memory_space<vmem>>, vector<1x80xf32>
    %31 = vector.broadcast %30 : vector<1x80xf32> to vector<5x80xf32>
    %32 = arith.addf %29, %31 : vector<5x80xf32>
    %cst_33 = arith.constant 0.000000e+00 : f32
    %33 = vector.broadcast %cst_33 : f32 to vector<5x80xf32>
    %34 = arith.maximumf %32, %33 : vector<5x80xf32>
    %c0_34 = arith.constant 0 : index
    %c0_35 = arith.constant 0 : index
    %35 = vector.load %arg15[%c0_34, %c0_35] : memref<5x80xf32, #tpu.memory_space<vmem>>, vector<5x80xf32>
    tpu.vector_store %arg15[%c0_34, %c0_35], %34 {strides = array<i32>} : memref<5x80xf32, #tpu.memory_space<vmem>>, vector<5x80xf32>,
    %c0_36 = arith.constant 0 : index
    %c0_37 = arith.constant 0 : index
    %36 = tpu.strided_load %arg15[%c0_36, %c0_37] {strides = array<i32: 2, 1>} : memref<5x80xf32, #tpu.memory_space<vmem>>, vector<2x80xf32>
    %c1_38 = arith.constant 1 : index
    %c0_39 = arith.constant 0 : index
    %37 = tpu.strided_load %arg15[%c1_38, %c0_39] {strides = array<i32: 2, 1>} : memref<5x80xf32, #tpu.memory_space<vmem>>, vector<2x80xf32>
    %38 = arith.maximumf %36, %37 : vector<2x80xf32>
    %39 = arith.truncf %38 : vector<2x80xf32> to vector<2x80xbf16>
    %c0_40 = arith.constant 0 : index
    %c0_41 = arith.constant 0 : index
    %40 = vector.load %arg8[%c0_40, %c0_41] : memref<80x32xbf16, #tpu.memory_space<vmem>>, vector<80x32xbf16>
    %cst_42 = arith.constant dense<0.000000e+00> : vector<2x32xf32>
    %41 = tpu.matmul %39, %40, %cst_42 {dimension_numbers = #tpu.dot_dimension_numbers<[1], [0], [0], [1], [0, 0, 1, 1], [], []>} : vector<2x80xbf16>, vector<80x32xbf16>, vector<2x32xf32> -> vector<2x32xf32>
    %c0_43 = arith.constant 0 : index
    %c0_44 = arith.constant 0 : index
    %42 = vector.load %arg9[%c0_43, %c0_44] : memref<80x32xbf16, #tpu.memory_space<vmem>>, vector<80x32xbf16>
    %cst_45 = arith.constant dense<0.000000e+00> : vector<2x32xf32>
    %43 = tpu.matmul %39, %42, %cst_45 {dimension_numbers = #tpu.dot_dimension_numbers<[1], [0], [0], [1], [0, 0, 1, 1], [], []>} : vector<2x80xbf16>, vector<80x32xbf16>, vector<2x32xf32> -> vector<2x32xf32>
    %44 = arith.maximumf %41, %43 : vector<2x32xf32>
    %c0_46 = arith.constant 0 : index
    %c0_47 = arith.constant 0 : index
    %45 = vector.load %arg16[%c0_46, %c0_47] : memref<2x32xf32, #tpu.memory_space<vmem>>, vector<2x32xf32>
    tpu.vector_store %arg16[%c0_46, %c0_47], %44 {strides = array<i32>} : memref<2x32xf32, #tpu.memory_space<vmem>>, vector<2x32xf32>,
    %c0_48 = arith.constant 0 : index
    %c0_49 = arith.constant 0 : index
    %46 = vector.load %arg16[%c0_48, %c0_49] : memref<2x32xf32, #tpu.memory_space<vmem>>, vector<1x32xf32>
    %c1_50 = arith.constant 1 : index
    %c0_51 = arith.constant 0 : index
    %47 = vector.load %arg16[%c1_50, %c0_51] : memref<2x32xf32, #tpu.memory_space<vmem>>, vector<1x32xf32>
    %48 = tpu.concatenate %46, %47 in 1 : vector<1x32xf32>, vector<1x32xf32> -> vector<1x64xf32>
    %49 = arith.truncf %48 : vector<1x64xf32> to vector<1x64xbf16>
    %c0_52 = arith.constant 0 : index
    %c0_53 = arith.constant 0 : index
    %50 = vector.load %arg10[%c0_52, %c0_53] : memref<64x5xbf16, #tpu.memory_space<vmem>>, vector<64x5xbf16>
    %cst_54 = arith.constant dense<0.000000e+00> : vector<1x5xf32>
    %51 = tpu.matmul %49, %50, %cst_54 {dimension_numbers = #tpu.dot_dimension_numbers<[1], [0], [0], [1], [0, 0, 1, 1], [], []>} : vector<1x64xbf16>, vector<64x5xbf16>, vector<1x5xf32> -> vector<1x5xf32>
    %c0_55 = arith.constant 0 : index
    %c0_56 = arith.constant 0 : index
    %52 = vector.load %arg11[%c0_55, %c0_56] : memref<1x5xf32, #tpu.memory_space<vmem>>, vector<1x5xf32>
    %53 = arith.addf %51, %52 : vector<1x5xf32>
    %c0_57 = arith.constant 0 : index
    %c0_58 = arith.constant 0 : index
    %c0_59 = arith.constant 0 : index
    %54 = vector.load %arg12[%c0_57, %c0_58, %c0_59] : memref<1x1x5xf32, #tpu.memory_space<vmem>>, vector<1x1x5xf32>
    %55 = vector.shape_cast %54 : vector<1x1x5xf32> to vector<1x5xf32>
    %56 = vector.shape_cast %53 : vector<1x5xf32> to vector<1x1x5xf32>
    tpu.vector_store %arg12[%c0_57, %c0_58, %c0_59], %56 {strides = array<i32>} : memref<1x1x5xf32, #tpu.memory_space<vmem>>, vector<1x1x5xf32>,
    return
  }
  func.func @transform_0(%arg0: i32) -> (i32, i32) {
    %c0_i32 = arith.constant 0 : i32
    %c0_i32_0 = arith.constant 0 : i32
    return %arg0, %c0_i32 : i32, i32
  }
  func.func @transform_1(%arg0: i32) -> (i32, i32) {
    %c0_i32 = arith.constant 0 : i32
    %c0_i32_0 = arith.constant 0 : i32
    %c0_i32_1 = arith.constant 0 : i32
    return %c0_i32, %c0_i32_0 : i32, i32
  }
  func.func @transform_2(%arg0: i32) -> (i32, i32) {
    %c0_i32 = arith.constant 0 : i32
    %c0_i32_0 = arith.constant 0 : i32
    %c0_i32_1 = arith.constant 0 : i32
    return %c0_i32, %c0_i32_0 : i32, i32
  }
  func.func @transform_3(%arg0: i32) -> (i32, i32) {
    %c0_i32 = arith.constant 0 : i32
    %c0_i32_0 = arith.constant 0 : i32
    %c0_i32_1 = arith.constant 0 : i32
    return %c0_i32, %c0_i32_0 : i32, i32
  }
  func.func @transform_4(%arg0: i32) -> (i32, i32) {
    %c0_i32 = arith.constant 0 : i32
    %c0_i32_0 = arith.constant 0 : i32
    %c0_i32_1 = arith.constant 0 : i32
    return %c0_i32, %c0_i32_0 : i32, i32
  }
  func.func @transform_5(%arg0: i32) -> (i32, i32) {
    %c0_i32 = arith.constant 0 : i32
    %c0_i32_0 = arith.constant 0 : i32
    %c0_i32_1 = arith.constant 0 : i32
    return %c0_i32, %c0_i32_0 : i32, i32
  }
  func.func @transform_6(%arg0: i32) -> (i32, i32) {
    %c0_i32 = arith.constant 0 : i32
    %c0_i32_0 = arith.constant 0 : i32
    %c0_i32_1 = arith.constant 0 : i32
    return %c0_i32, %c0_i32_0 : i32, i32
  }
  func.func @transform_7(%arg0: i32) -> (i32, i32) {
    %c0_i32 = arith.constant 0 : i32
    %c0_i32_0 = arith.constant 0 : i32
    %c0_i32_1 = arith.constant 0 : i32
    return %c0_i32, %c0_i32_0 : i32, i32
  }
  func.func @transform_8(%arg0: i32) -> (i32, i32) {
    %c0_i32 = arith.constant 0 : i32
    %c0_i32_0 = arith.constant 0 : i32
    %c0_i32_1 = arith.constant 0 : i32
    return %c0_i32, %c0_i32_0 : i32, i32
  }
  func.func @transform_9(%arg0: i32) -> (i32, i32) {
    %c0_i32 = arith.constant 0 : i32
    %c0_i32_0 = arith.constant 0 : i32
    %c0_i32_1 = arith.constant 0 : i32
    return %c0_i32, %c0_i32_0 : i32, i32
  }
  func.func @transform_10(%arg0: i32) -> (i32, i32) {
    %c0_i32 = arith.constant 0 : i32
    %c0_i32_0 = arith.constant 0 : i32
    %c0_i32_1 = arith.constant 0 : i32
    return %c0_i32, %c0_i32_0 : i32, i32
  }
  func.func @transform_11(%arg0: i32) -> (i32, i32, i32) {
    %c0_i32 = arith.constant 0 : i32
    %c0_i32_0 = arith.constant 0 : i32
    %c0_i32_1 = arith.constant 0 : i32
    return %arg0, %c0_i32, %c0_i32_0 : i32, i32, i32
  }
}

</mosaic_0001>

<llo_original>
// kernel: _lambda_.1
$region0: #{_lambda_.1}
  #allocation0 [shape = 'u32[]', space=smem, size = 0x4, offset = 0x4, fixed_abs, tag = 'smem constant byte address 0x4 - core index']
  #allocation1 [shape = 'u32[144,128]{1,0:T(1,128)}', space=vmem, size = 0x12000, scoped, tag = 'internal scratch']
  #allocation2 [shape = 'f32[14,112]{1,0:T(8,128)}', space=vmem, size = 0x2000, scoped, tag = 'scratch operand']
  #allocation3 [shape = 'f32[7,56]{1,0:T(8,128)}', space=vmem, size = 0x1000, scoped, tag = 'scratch operand']
  #allocation4 [shape = 'f32[5,80]{1,0:T(8,128)}', space=vmem, size = 0x1000, scoped, tag = 'scratch operand']
  #allocation5 [shape = 'f32[2,32]{1,0:T(2,128)}', space=vmem, size = 0x400, scoped, tag = 'scratch operand']
  %s0 = inlined_call_operand.vmem [shape: f32[32,64], index: 0, kind: input, shape index: {}]
  %s1 = inlined_call_operand.vmem [shape: bf16[192,112], index: 1, kind: input, shape index: {}]
  %s2 = inlined_call_operand.vmem [shape: f32[1,112], index: 2, kind: input, shape index: {}]
  %s3 = inlined_call_operand.vmem [shape: bf16[112,56], index: 3, kind: input, shape index: {}]
  %s4 = inlined_call_operand.vmem [shape: bf16[112,56], index: 4, kind: input, shape index: {}]
  %s5 = inlined_call_operand.vmem [shape: bf16[168,80], index: 5, kind: input, shape index: {}]
  %s6 = inlined_call_operand.vmem [shape: f32[1,80], index: 6, kind: input, shape index: {}]
  %s7 = inlined_call_operand.vmem [shape: bf16[80,32], index: 7, kind: input, shape index: {}]
  %s8 = inlined_call_operand.vmem [shape: bf16[80,32], index: 8, kind: input, shape index: {}]
  %s9 = inlined_call_operand.vmem [shape: bf16[64,5], index: 9, kind: input, shape index: {}]
  %s10 = inlined_call_operand.vmem [shape: f32[1,5], index: 10, kind: input, shape index: {}]
  %s11 = inlined_call_operand.hbm [shape: f32[2,1,5], index: 11, kind: output, shape index: {}]
  %s12 = sld [smem:[#allocation0]]
  $region77: #{_lambda_.1} parent=0
    _
  %s14 = ssub.s32 1, %s12
  %s15 = scalar_select 0, %s14, %s12
  $region1: #{_lambda_.1} parent=0
    #allocation6 [shape = 'u8[1024]{0}', space=vmem, size = 0x400, scoped, tag = 'output window, operand 0']
    #allocation7 [shape = 's32[2]{0}', space=sflag, size = 0x8, scoped, tag = 'scoped memory for _lambda_.1']
    %16 = vsyncpa [#allocation7], 0
    %s17 = scalar_lea.sflag [#allocation7], 1
    %18 = vsyncpa %s17, 0
    loop: start=0, step=1, limit=4
    $region2: #{_lambda_.1} parent=1 // loop_pre_header
      _
    $region3: #{_lambda_.1} parent=1 // loop_header
      %s20 = sphi 0, %s24
      %p21 = scmp.ge.s32.totalorder %s20, 4
      %s30 = sphi 0, %s32
      %s33 = sphi 0, %s30
      %s34 = sphi 0, %s33
      %s50 = sphi 0, %s34
      %s54 = sphi 0, %s54
      %s56 = sphi 0, %s54
      %s57 = sphi 0, %s56
      %s71 = sphi 0, %s57
      %s75 = sphi 0, %s75
      %s77 = sphi 0, %s75
      %s78 = sphi 0, %s77
      %s92 = sphi 0, %s78
      %s96 = sphi 0, %s96
      %s98 = sphi 0, %s96
      %s99 = sphi 0, %s98
      %s113 = sphi 0, %s99
      %s117 = sphi 0, %s117
      %s119 = sphi 0, %s117
      %s120 = sphi 0, %s119
      %s134 = sphi 0, %s120
      %s138 = sphi 0, %s138
      %s140 = sphi 0, %s138
      %s141 = sphi 0, %s140
      %s155 = sphi 0, %s141
      %s159 = sphi 0, %s159
      %s161 = sphi 0, %s159
      %s162 = sphi 0, %s161
      %s176 = sphi 0, %s162
      %s180 = sphi 0, %s180
      %s182 = sphi 0, %s180
      %s183 = sphi 0, %s182
      %s197 = sphi 0, %s183
      %s201 = sphi 0, %s201
      %s203 = sphi 0, %s201
      %s204 = sphi 0, %s203
      %s218 = sphi 0, %s204
      %s222 = sphi 0, %s222
      %s224 = sphi 0, %s222
      %s225 = sphi 0, %s224
      %s239 = sphi 0, %s225
      %s243 = sphi 0, %s243
      %s245 = sphi 0, %s243
      %s246 = sphi 0, %s245
      %s260 = sphi 0, %s246
      %s266 = sphi 0, %s268
      %s269 = sphi 0, %s266
      %s270 = sphi 0, %s269
      %s286 = sphi 0, %s270
    $region4: #{_lambda_.1} parent=1 // loop_header_branch
      %23 = sbr.rel (%p21) target = $region8
    $region5: #{_lambda_.1} parent=1 // loop_body
      %s25 = ssub.s32 %s20, 1
      %s26 = ssub.s32 %s20, 2
      %s27 = sadd.s32 %s20, 1
      %s28 = ssub.s32 %s20, %s27
      %p29 = scmp.eq.s32.totalorder %s28, 0
      %s31 = sadd.s32 %s30, 1
      %s32 = scalar_select %p29, %s30, %s31
      %p35 = pneg %p29
      %p36 = scmp.eq.s32.totalorder %s20, 1
      %p37 = por %p35, %p36
      %p38 = scmp.ne.s32.totalorder %s30, %s33
      %p39 = scmp.eq.s32.totalorder %s20, 0
      %p40 = por %p38, %p39
      %p41 = scmp.ne.s32.totalorder %s30, %s33
      %p42 = scmp.eq.s32.totalorder %s25, 1
      %p43 = por %p41, %p42
      %p44 = scmp.ne.s32.totalorder %s33, %s34
      %p45 = scmp.eq.s32.totalorder %s25, 0
      %p46 = por %p44, %p45
      %p47 = scmp.ne.s32.totalorder %s33, %s34
      %p48 = scmp.eq.s32.totalorder %s26, 1
      %p49 = por %p47, %p48
      %p51 = scmp.ne.s32.totalorder %s34, %s50
      %p52 = scmp.eq.s32.totalorder %s26, 0
      %p53 = por %p51, %p52
      %s55 = sadd.s32 %s54, 1
      %p58 = scmp.eq.s32.totalorder %s20, 1
      %p59 = scmp.ne.s32.totalorder %s54, %s56
      %p60 = scmp.eq.s32.totalorder %s20, 0
      %p61 = por %p59, %p60
      %p62 = scmp.ne.s32.totalorder %s54, %s56
      %p63 = scmp.eq.s32.totalorder %s25, 1
      %p64 = por %p62, %p63
      %p65 = scmp.ne.s32.totalorder %s56, %s57
      %p66 = scmp.eq.s32.totalorder %s25, 0
      %p67 = por %p65, %p66
      %p68 = scmp.ne.s32.totalorder %s56, %s57
      %p69 = scmp.eq.s32.totalorder %s26, 1
      %p70 = por %p68, %p69
      %p72 = scmp.ne.s32.totalorder %s57, %s71
      %p73 = scmp.eq.s32.totalorder %s26, 0
      %p74 = por %p72, %p73
      %s76 = sadd.s32 %s75, 1
      %p79 = scmp.eq.s32.totalorder %s20, 1
      %p80 = scmp.ne.s32.totalorder %s75, %s77
      %p81 = scmp.eq.s32.totalorder %s20, 0
      %p82 = por %p80, %p81
      %p83 = scmp.ne.s32.totalorder %s75, %s77
      %p84 = scmp.eq.s32.totalorder %s25, 1
      %p85 = por %p83, %p84
      %p86 = scmp.ne.s32.totalorder %s77, %s78
      %p87 = scmp.eq.s32.totalorder %s25, 0
      %p88 = por %p86, %p87
      %p89 = scmp.ne.s32.totalorder %s77, %s78
      %p90 = scmp.eq.s32.totalorder %s26, 1
      %p91 = por %p89, %p90
      %p93 = scmp.ne.s32.totalorder %s78, %s92
      %p94 = scmp.eq.s32.totalorder %s26, 0
      %p95 = por %p93, %p94
      %s97 = sadd.s32 %s96, 1
      %p100 = scmp.eq.s32.totalorder %s20, 1
      %p101 = scmp.ne.s32.totalorder %s96, %s98
      %p102 = scmp.eq.s32.totalorder %s20, 0
      %p103 = por %p101, %p102
      %p104 = scmp.ne.s32.totalorder %s96, %s98
      %p105 = scmp.eq.s32.totalorder %s25, 1
      %p106 = por %p104, %p105
      %p107 = scmp.ne.s32.totalorder %s98, %s99
      %p108 = scmp.eq.s32.totalorder %s25, 0
      %p109 = por %p107, %p108
      %p110 = scmp.ne.s32.totalorder %s98, %s99
      %p111 = scmp.eq.s32.totalorder %s26, 1
      %p112 = por %p110, %p111
      %p114 = scmp.ne.s32.totalorder %s99, %s113
      %p115 = scmp.eq.s32.totalorder %s26, 0
      %p116 = por %p114, %p115
      %s118 = sadd.s32 %s117, 1
      %p121 = scmp.eq.s32.totalorder %s20, 1
      %p122 = scmp.ne.s32.totalorder %s117, %s119
      %p123 = scmp.eq.s32.totalorder %s20, 0
      %p124 = por %p122, %p123
      %p125 = scmp.ne.s32.totalorder %s117, %s119
      %p126 = scmp.eq.s32.totalorder %s25, 1
      %p127 = por %p125, %p126
      %p128 = scmp.ne.s32.totalorder %s119, %s120
      %p129 = scmp.eq.s32.totalorder %s25, 0
      %p130 = por %p128, %p129
      %p131 = scmp.ne.s32.totalorder %s119, %s120
      %p132 = scmp.eq.s32.totalorder %s26, 1
      %p133 = por %p131, %p132
      %p135 = scmp.ne.s32.totalorder %s120, %s134
      %p136 = scmp.eq.s32.totalorder %s26, 0
      %p137 = por %p135, %p136
      %s139 = sadd.s32 %s138, 1
      %p142 = scmp.eq.s32.totalorder %s20, 1
      %p143 = scmp.ne.s32.totalorder %s138, %s140
      %p144 = scmp.eq.s32.totalorder %s20, 0
      %p145 = por %p143, %p144
      %p146 = scmp.ne.s32.totalorder %s138, %s140
      %p147 = scmp.eq.s32.totalorder %s25, 1
      %p148 = por %p146, %p147
      %p149 = scmp.ne.s32.totalorder %s140, %s141
      %p150 = scmp.eq.s32.totalorder %s25, 0
      %p151 = por %p149, %p150
      %p152 = scmp.ne.s32.totalorder %s140, %s141
      %p153 = scmp.eq.s32.totalorder %s26, 1
      %p154 = por %p152, %p153
      %p156 = scmp.ne.s32.totalorder %s141, %s155
      %p157 = scmp.eq.s32.totalorder %s26, 0
      %p158 = por %p156, %p157
      %s160 = sadd.s32 %s159, 1
      %p163 = scmp.eq.s32.totalorder %s20, 1
      %p164 = scmp.ne.s32.totalorder %s159, %s161
      %p165 = scmp.eq.s32.totalorder %s20, 0
      %p166 = por %p164, %p165
      %p167 = scmp.ne.s32.totalorder %s159, %s161
      %p168 = scmp.eq.s32.totalorder %s25, 1
      %p169 = por %p167, %p168
      %p170 = scmp.ne.s32.totalorder %s161, %s162
      %p171 = scmp.eq.s32.totalorder %s25, 0
      %p172 = por %p170, %p171
      %p173 = scmp.ne.s32.totalorder %s161, %s162
      %p174 = scmp.eq.s32.totalorder %s26, 1
      %p175 = por %p173, %p174
      %p177 = scmp.ne.s32.totalorder %s162, %s176
      %p178 = scmp.eq.s32.totalorder %s26, 0
      %p179 = por %p177, %p178
      %s181 = sadd.s32 %s180, 1
      %p184 = scmp.eq.s32.totalorder %s20, 1
      %p185 = scmp.ne.s32.totalorder %s180, %s182
      %p186 = scmp.eq.s32.totalorder %s20, 0
      %p187 = por %p185, %p186
      %p188 = scmp.ne.s32.totalorder %s180, %s182
      %p189 = scmp.eq.s32.totalorder %s25, 1
      %p190 = por %p188, %p189
      %p191 = scmp.ne.s32.totalorder %s182, %s183
      %p192 = scmp.eq.s32.totalorder %s25, 0
      %p193 = por %p191, %p192
      %p194 = scmp.ne.s32.totalorder %s182, %s183
      %p195 = scmp.eq.s32.totalorder %s26, 1
      %p196 = por %p194, %p195
      %p198 = scmp.ne.s32.totalorder %s183, %s197
      %p199 = scmp.eq.s32.totalorder %s26, 0
      %p200 = por %p198, %p199
      %s202 = sadd.s32 %s201, 1
      %p205 = scmp.eq.s32.totalorder %s20, 1
      %p206 = scmp.ne.s32.totalorder %s201, %s203
      %p207 = scmp.eq.s32.totalorder %s20, 0
      %p208 = por %p206, %p207
      %p209 = scmp.ne.s32.totalorder %s201, %s203
      %p210 = scmp.eq.s32.totalorder %s25, 1
      %p211 = por %p209, %p210
      %p212 = scmp.ne.s32.totalorder %s203, %s204
      %p213 = scmp.eq.s32.totalorder %s25, 0
      %p214 = por %p212, %p213
      %p215 = scmp.ne.s32.totalorder %s203, %s204
      %p216 = scmp.eq.s32.totalorder %s26, 1
      %p217 = por %p215, %p216
      %p219 = scmp.ne.s32.totalorder %s204, %s218
      %p220 = scmp.eq.s32.totalorder %s26, 0
      %p221 = por %p219, %p220
      %s223 = sadd.s32 %s222, 1
      %p226 = scmp.eq.s32.totalorder %s20, 1
      %p227 = scmp.ne.s32.totalorder %s222, %s224
      %p228 = scmp.eq.s32.totalorder %s20, 0
      %p229 = por %p227, %p228
      %p230 = scmp.ne.s32.totalorder %s222, %s224
      %p231 = scmp.eq.s32.totalorder %s25, 1
      %p232 = por %p230, %p231
      %p233 = scmp.ne.s32.totalorder %s224, %s225
      %p234 = scmp.eq.s32.totalorder %s25, 0
      %p235 = por %p233, %p234
      %p236 = scmp.ne.s32.totalorder %s224, %s225
      %p237 = scmp.eq.s32.totalorder %s26, 1
      %p238 = por %p236, %p237
      %p240 = scmp.ne.s32.totalorder %s225, %s239
      %p241 = scmp.eq.s32.totalorder %s26, 0
      %p242 = por %p240, %p241
      %s244 = sadd.s32 %s243, 1
      %p247 = scmp.eq.s32.totalorder %s20, 1
      %p248 = scmp.ne.s32.totalorder %s243, %s245
      %p249 = scmp.eq.s32.totalorder %s20, 0
      %p250 = por %p248, %p249
      %p251 = scmp.ne.s32.totalorder %s243, %s245
      %p252 = scmp.eq.s32.totalorder %s25, 1
      %p253 = por %p251, %p252
      %p254 = scmp.ne.s32.totalorder %s245, %s246
      %p255 = scmp.eq.s32.totalorder %s25, 0
      %p256 = por %p254, %p255
      %p257 = scmp.ne.s32.totalorder %s245, %s246
      %p258 = scmp.eq.s32.totalorder %s26, 1
      %p259 = por %p257, %p258
      %p261 = scmp.ne.s32.totalorder %s246, %s260
      %p262 = scmp.eq.s32.totalorder %s26, 0
      %p263 = por %p261, %p262
      %s264 = ssub.s32 %s20, %s27
      %p265 = scmp.eq.s32.totalorder %s264, 0
      %s267 = sadd.s32 %s266, 1
      %s268 = scalar_select %p265, %s266, %s267
      %p271 = pneg %p265
      %p272 = scmp.eq.s32.totalorder %s20, 1
      %p273 = por %p271, %p272
      %p274 = scmp.ne.s32.totalorder %s266, %s269
      %p275 = scmp.eq.s32.totalorder %s20, 0
      %p276 = por %p274, %p275
      %p277 = scmp.ne.s32.totalorder %s266, %s269
      %p278 = scmp.eq.s32.totalorder %s25, 1
      %p279 = por %p277, %p278
      %p280 = scmp.ne.s32.totalorder %s269, %s270
      %p281 = scmp.eq.s32.totalorder %s25, 0
      %p282 = por %p280, %p281
      %p283 = scmp.ne.s32.totalorder %s269, %s270
      %p284 = scmp.eq.s32.totalorder %s26, 1
      %p285 = por %p283, %p284
      %p287 = scmp.ne.s32.totalorder %s270, %s286
      %p288 = scmp.eq.s32.totalorder %s26, 0
      %p289 = por %p287, %p288
      %p290 = scmp.le.s32.totalorder 1, %s20
      %p291 = scmp.lt.s32.totalorder %s20, 3
      %p292 = pnand %p290, %p291
      %p293 = pneg %p292
      // Predicated region
      $region9: #{_lambda_.1} parent=5 // pred_check
        _
      $region10: #{_lambda_.1} parent=5 // pred_check_branch
        %295 = sbr.rel (%p292) target = $region12
      $region11: #{_lambda_.1} parent=5 // pred_region
        %s296 = ssub.s32 %s20, 1
        // Predicated region
        $region13: #{_lambda_.1} parent=11 // pred_check
          %p297 = pneg %p67
        $region14: #{_lambda_.1} parent=11 // pred_check_branch
          %299 = sbr.rel (%p297) target = $region16
        $region15: #{_lambda_.1} parent=11 // pred_region
          _
        $region16: #{_lambda_.1} parent=11 // pred_fallthru
          _
        // Predicated region
        $region17: #{_lambda_.1} parent=11 // pred_check
          %p300 = pneg %p88
        $region18: #{_lambda_.1} parent=11 // pred_check_branch
          %302 = sbr.rel (%p300) target = $region20
        $region19: #{_lambda_.1} parent=11 // pred_region
          _
        $region20: #{_lambda_.1} parent=11 // pred_fallthru
          _
        // Predicated region
        $region21: #{_lambda_.1} parent=11 // pred_check
          %p303 = pneg %p109
        $region22: #{_lambda_.1} parent=11 // pred_check_branch
          %305 = sbr.rel (%p303) target = $region24
        $region23: #{_lambda_.1} parent=11 // pred_region
          _
        $region24: #{_lambda_.1} parent=11 // pred_fallthru
          _
        // Predicated region
        $region25: #{_lambda_.1} parent=11 // pred_check
          %p306 = pneg %p130
        $region26: #{_lambda_.1} parent=11 // pred_check_branch
          %308 = sbr.rel (%p306) target = $region28
        $region27: #{_lambda_.1} parent=11 // pred_region
          _
        $region28: #{_lambda_.1} parent=11 // pred_fallthru
          _
        // Predicated region
        $region29: #{_lambda_.1} parent=11 // pred_check
          %p309 = pneg %p151
        $region30: #{_lambda_.1} parent=11 // pred_check_branch
          %311 = sbr.rel (%p309) target = $region32
        $region31: #{_lambda_.1} parent=11 // pred_region
          _
        $region32: #{_lambda_.1} parent=11 // pred_fallthru
          _
        // Predicated region
        $region33: #{_lambda_.1} parent=11 // pred_check
          %p312 = pneg %p172
        $region34: #{_lambda_.1} parent=11 // pred_check_branch
          %314 = sbr.rel (%p312) target = $region36
        $region35: #{_lambda_.1} parent=11 // pred_region
          _
        $region36: #{_lambda_.1} parent=11 // pred_fallthru
          _
        // Predicated region
        $region37: #{_lambda_.1} parent=11 // pred_check
          %p315 = pneg %p193
        $region38: #{_lambda_.1} parent=11 // pred_check_branch
          %317 = sbr.rel (%p315) target = $region40
        $region39: #{_lambda_.1} parent=11 // pred_region
          _
        $region40: #{_lambda_.1} parent=11 // pred_fallthru
          _
        // Predicated region
        $region41: #{_lambda_.1} parent=11 // pred_check
          %p318 = pneg %p214
        $region42: #{_lambda_.1} parent=11 // pred_check_branch
          %320 = sbr.rel (%p318) target = $region44
        $region43: #{_lambda_.1} parent=11 // pred_region
          _
        $region44: #{_lambda_.1} parent=11 // pred_fallthru
          _
        // Predicated region
        $region45: #{_lambda_.1} parent=11 // pred_check
          %p321 = pneg %p235
        $region46: #{_lambda_.1} parent=11 // pred_check_branch
          %323 = sbr.rel (%p321) target = $region48
        $region47: #{_lambda_.1} parent=11 // pred_region
          _
        $region48: #{_lambda_.1} parent=11 // pred_fallthru
          _
        // Predicated region
        $region49: #{_lambda_.1} parent=11 // pred_check
          %p324 = pneg %p256
        $region50: #{_lambda_.1} parent=11 // pred_check_branch
          %326 = sbr.rel (%p324) target = $region52
        $region51: #{_lambda_.1} parent=11 // pred_region
          _
        $region52: #{_lambda_.1} parent=11 // pred_fallthru
          _
      $region12: #{_lambda_.1} parent=5 // pred_fallthru
        _
      %p327 = scmp.lt.s32.totalorder %s20, 2
      // Predicated region
      $region53: #{_lambda_.1} parent=5 // pred_check
        %p328 = pneg %p327
      $region54: #{_lambda_.1} parent=5 // pred_check_branch
        %330 = sbr.rel (%p328) target = $region56
      $region55: #{_lambda_.1} parent=5 // pred_region
        // Predicated region
        $region57: #{_lambda_.1} parent=55 // pred_check
          %p331 = pneg %p40
        $region58: #{_lambda_.1} parent=55 // pred_check_branch
          %333 = sbr.rel (%p331) target = $region60
        $region59: #{_lambda_.1} parent=55 // pred_region
          %s334 = smul.u32 2, %s20
          %p335 = scmp.lt.s32.totalorder %s334, 3
          %s336 = scalar_select %p335, %s334, 3
          %s337 = smul.addr %s336, 8
          %s338 = scalar_lea.vmem %s0, %s337
          %s339 = smul.u32 2, %s20
        $region60: #{_lambda_.1} parent=55 // pred_fallthru
          _
      $region56: #{_lambda_.1} parent=5 // pred_fallthru
        _
      %p340 = scmp.le.s32.totalorder 1, %s20
      %p341 = scmp.lt.s32.totalorder %s20, 3
      %p342 = pnand %p340, %p341
      %p343 = pneg %p342
      // Predicated region
      $region61: #{_lambda_.1} parent=5 // pred_check
        _
      $region62: #{_lambda_.1} parent=5 // pred_check_branch
        %345 = sbr.rel (%p342) target = $region64
      $region63: #{_lambda_.1} parent=5 // pred_region
        %s346 = ssub.s32 %s20, 1
        %s347 = smul.u32 2, %s25
        %p348 = scmp.lt.s32.totalorder %s347, 3
        %s349 = scalar_select %p348, %s347, 3
        %s350 = smul.addr %s349, 8
        %s351 = scalar_lea.vmem %s0, %s350
        %p352 = pneg %p46
        %p353 = pneg %p43
        %p354 = pneg %p67
        %p355 = pneg %p64
        %p356 = pneg %p88
        %p357 = pneg %p85
        %p358 = pneg %p109
        %p359 = pneg %p106
        %p360 = pneg %p130
        %p361 = pneg %p127
        %p362 = pneg %p151
        %p363 = pneg %p148
        %p364 = pneg %p172
        %p365 = pneg %p169
        %p366 = pneg %p193
        %p367 = pneg %p190
        %p368 = pneg %p214
        %p369 = pneg %p211
        %p370 = pneg %p235
        %p371 = pneg %p232
        %p372 = pneg %p256
        %p373 = pneg %p253
        %p374 = pneg %p282
        %p375 = pneg %p279
        %s376 = sand.u32 %s269, 1
        %s377 = scalar_lea.sflag [#allocation7], %s376
        %s378 = sand.u32 %s269, 1
        %s379 = scalar_lea.vmem [#allocation6], %s378
        %s380 = smul.u32 2, %s25
        %p381 = scmp.lt.s32.totalorder %s380, 3
        %s382 = scalar_select %p381, %s380, 3
        %s383 = smul.addr %s382, 8
        %s384 = scalar_lea.vmem %s0, %s383
        %s385 = smul.u32 2, %s25
        %v387 = vld [vmem:[%s384] sm:$0xff]
        %v388 = vld [vmem:[%s384 + $0x8] sm:$0x3f]
        %v389 = vld [vmem:[%s384 + $0x1] sm:$0xff]
        %v390 = vld [vmem:[%s384 + $0x9] sm:$0x3f]
        %v391 = vld [vmem:[%s384 + $0x2] sm:$0xff]
        %v392 = vld [vmem:[%s384 + $0xa] sm:$0x3f]
        %395 = vrot.lane.b32.xlu0 %v389, 64
        %v396 = vpop.permute.xlu0 %395
        %397 = vrot.lane.b32.xlu0 %v390, 64
        %v398 = vpop.permute.xlu0 %397
        %vm401 = vcmask 523264
        %v402 = vsel %vm401, %v387, %v396
        %v403 = vsel %vm401, %v388, %v398
        %v404 = vpack.c.bf16 %v403, %v402
        %v405 = vpack.c.bf16 %v392, %v391
        %v406 = vld [vmem:[%s1] sm:$0xf]
        %v407 = vld [vmem:[%s1 + $0x4] sm:$0xf]
        %v408 = vld [vmem:[%s1 + $0x8] sm:$0xf]
        %v409 = vld [vmem:[%s1 + $0xc] sm:$0xf]
        %v410 = vld [vmem:[%s1 + $0x10] sm:$0xf]
        %v411 = vld [vmem:[%s1 + $0x14] sm:$0xf]
        %v412 = vld [vmem:[%s1 + $0x18] sm:$0xf]
        %v413 = vld [vmem:[%s1 + $0x1c] sm:$0xf]
        %v414 = vld [vmem:[%s1 + $0x20] sm:$0xf]
        %v415 = vld [vmem:[%s1 + $0x24] sm:$0xf]
        %v416 = vld [vmem:[%s1 + $0x28] sm:$0xf]
        %v417 = vld [vmem:[%s1 + $0x2c] sm:$0xf]
        %v418 = vld [vmem:[%s1 + $0x30] sm:$0xf]
        %v419 = vld [vmem:[%s1 + $0x34] sm:$0xf]
        %v420 = vld [vmem:[%s1 + $0x38] sm:$0xf]
        %v421 = vld [vmem:[%s1 + $0x3c] sm:$0xf]
        %v422 = vld [vmem:[%s1 + $0x40] sm:$0xf]
        %v423 = vld [vmem:[%s1 + $0x44] sm:$0xf]
        %v424 = vld [vmem:[%s1 + $0x48] sm:$0xf]
        %v425 = vld [vmem:[%s1 + $0x4c] sm:$0xf]
        %v426 = vld [vmem:[%s1 + $0x50] sm:$0xf]
        %v427 = vld [vmem:[%s1 + $0x54] sm:$0xf]
        %v428 = vld [vmem:[%s1 + $0x58] sm:$0xf]
        %v429 = vld [vmem:[%s1 + $0x5c] sm:$0xf]
        %v430 = vld [vmem:[%s2] sm:$0x1]
        %v432 = vlaneseq
        %v433 = vshrl.u32 %v432, 7
        %v434 = vsub.s32 0, %v433
        %v435 = vrot.slane %v430, %v434
        %v461 = vunpack.c.l.b16 %v406
        %v462 = vunpack.c.l.b16 %v407
        %v463 = vunpack.c.l.b16 %v408
        %v464 = vunpack.c.l.b16 %v409
        %v465 = vunpack.c.l.b16 %v410
        %v466 = vunpack.c.l.b16 %v411
        %v467 = vunpack.c.l.b16 %v412
        %v468 = vunpack.c.l.b16 %v413
        %v469 = vunpack.c.l.b16 %v414
        %v470 = vunpack.c.l.b16 %v415
        %v471 = vunpack.c.l.b16 %v416
        %v472 = vunpack.c.l.b16 %v417
        %v473 = vunpack.c.l.b16 %v418
        %v474 = vunpack.c.l.b16 %v419
        %v475 = vunpack.c.l.b16 %v420
        %v476 = vunpack.c.l.b16 %v421
        %v477 = vunpack.c.l.b16 %v422
        %v478 = vunpack.c.l.b16 %v423
        %v479 = vunpack.c.l.b16 %v424
        %v480 = vunpack.c.l.b16 %v425
        %v481 = vunpack.c.l.b16 %v426
        %v482 = vunpack.c.l.b16 %v427
        %v483 = vunpack.c.l.b16 %v428
        %v484 = vunpack.c.l.b16 %v429
        %v485 = vpack.c.b16 %v462, %v461
        %v486 = vpack.c.b16 %v464, %v463
        %v487 = vpack.c.b16 %v466, %v465
        %v488 = vpack.c.b16 %v468, %v467
        %v489 = vpack.c.b16 %v470, %v469
        %v490 = vpack.c.b16 %v472, %v471
        %v491 = vpack.c.b16 %v474, %v473
        %v492 = vpack.c.b16 %v476, %v475
        %v493 = vpack.c.b16 %v478, %v477
        %v494 = vpack.c.b16 %v480, %v479
        %v495 = vpack.c.b16 %v482, %v481
        %v496 = vpack.c.b16 %v484, %v483
        %v510 = vsel %vm401, %v405, 0
        %512 = vmatprep.subr.bf16.mxu0 0
        %513 = vmatpush1.bf16.msra.mxu0 %v485
        %514 = vmatprep.subr.bf16.mxu0 0
        %515 = vmatpush1.bf16.msra.mxu0 %v486
        %516 = vmatprep.subr.bf16.mxu0 0
        %517 = vmatpush1.bf16.msra.mxu0 %v487
        %518 = vmatprep.subr.bf16.mxu0 0
        %519 = vmatpush1.bf16.msra.mxu0 %v488
        %520 = vmatprep.subr.bf16.mxu0 0
        %521 = vmatpush1.bf16.msra.mxu0 %v489
        %522 = vmatprep.subr.bf16.mxu0 0
        %523 = vmatpush1.bf16.msra.mxu0 %v490
        %524 = vmatprep.subr.bf16.mxu0 0
        %525 = vmatpush1.bf16.msra.mxu0 %v491
        %526 = vmatprep.subr.bf16.mxu0 0
        %527 = vmatpush1.bf16.msra.mxu0 %v492
        %528 = vmatprep.subr.bf16.mxu0 0
        %529 = vmatpush1.bf16.msra.mxu0 %v493
        %530 = vmatprep.subr.bf16.mxu0 0
        %531 = vmatpush1.bf16.msra.mxu0 %v494
        %532 = vmatprep.subr.bf16.mxu0 0
        %533 = vmatpush1.bf16.msra.mxu0 %v495
        %534 = vmatprep.subr.bf16.mxu0 0
        %535 = vmatpush1.bf16.msra.mxu0 %v496
        %536 = vmatprep.subr.bf16.mxu0 0
        %537 = vmatpush1.bf16.msra.mxu0 0
        %538 = vmatprep.subr.bf16.mxu0 0
        %539 = vmatpush1.bf16.msra.mxu0 0
        %540 = vmatprep.subr.bf16.mxu0 0
        %541 = vmatpush1.bf16.msra.mxu0 0
        %542 = vmatprep.subr.bf16.mxu0 0
        %543 = vmatpush1.bf16.msra.mxu0 0
        %544 = vmatprep.mubr.bf16.mxu0 %v510
        %545 = vmatmul.mubr.bf16.gmra.mrb[0].mxu0 %v404
        %v546 = vpop.f32.mrb[0].mxu0
        %v547 = vadd.f32 %v435, %v546
        %v548 = vpop.f32.mrb[0].mxu0
        %v549 = vpop.f32.mrb[0].mxu0
        %v550 = vadd.f32 %v435, %v549
        %v551 = vpop.f32.mrb[0].mxu0
        %552 = vdwg.mxu0
        %v553 = vmax.f32 %v547, 0.0
        %v554 = vmax.f32 %v550, 0.0
        %vm555 = vcmask 916480
        %556 = vst.msk [vmem:[#allocation2] sm:$0xff] %vm555, %v553
        %vm557 = vcmask 914432
        %558 = vst.msk [vmem:[#allocation2 + $0x8] sm:$0x3f] %vm557, %v554
        %v559 = vld [vmem:[#allocation2] ss:$2 sm:$0x7f]
        %s560 = scalar_lea.vmem [#allocation2], 1
        %v561 = vld [vmem:[%s560] ss:$2 sm:$0x7f]
        %v562 = vmax.f32 %v559, %v561
        %v563 = vpack.c.bf16 %v562, %v562
        %v564 = vld [vmem:[%s3] sm:$0xf]
        %v565 = vld [vmem:[%s3 + $0x4] sm:$0xf]
        %v566 = vld [vmem:[%s3 + $0x8] sm:$0xf]
        %v567 = vld [vmem:[%s3 + $0xc] sm:$0xf]
        %v568 = vld [vmem:[%s3 + $0x10] sm:$0xf]
        %v569 = vld [vmem:[%s3 + $0x14] sm:$0xf]
        %v570 = vld [vmem:[%s3 + $0x18] sm:$0xf]
        %v571 = vld [vmem:[%s3 + $0x1c] sm:$0xf]
        %v572 = vld [vmem:[%s3 + $0x20] sm:$0xf]
        %v573 = vld [vmem:[%s3 + $0x24] sm:$0xf]
        %v574 = vld [vmem:[%s3 + $0x28] sm:$0xf]
        %v575 = vld [vmem:[%s3 + $0x2c] sm:$0xf]
        %v576 = vld [vmem:[%s3 + $0x30] sm:$0xf]
        %v577 = vld [vmem:[%s3 + $0x34] sm:$0xf]
        %v592 = vunpack.c.l.b16 %v564
        %v593 = vunpack.c.l.b16 %v565
        %v594 = vunpack.c.l.b16 %v566
        %v595 = vunpack.c.l.b16 %v567
        %v596 = vunpack.c.l.b16 %v568
        %v597 = vunpack.c.l.b16 %v569
        %v598 = vunpack.c.l.b16 %v570
        %v599 = vunpack.c.l.b16 %v571
        %v600 = vunpack.c.l.b16 %v572
        %v601 = vunpack.c.l.b16 %v573
        %v602 = vunpack.c.l.b16 %v574
        %v603 = vunpack.c.l.b16 %v575
        %v604 = vunpack.c.l.b16 %v576
        %v605 = vunpack.c.l.b16 %v577
        %v606 = vpack.c.b16 %v593, %v592
        %v607 = vpack.c.b16 %v595, %v594
        %v608 = vpack.c.b16 %v597, %v596
        %v609 = vpack.c.b16 %v599, %v598
        %v610 = vpack.c.b16 %v601, %v600
        %v611 = vpack.c.b16 %v603, %v602
        %v612 = vpack.c.b16 %v605, %v604
        %v621 = vsel %vm555, %v563, 0
        %623 = vmatprep.subr.bf16.mxu0 0
        %624 = vmatpush1.bf16.msra.mxu0 %v606
        %625 = vmatprep.subr.bf16.mxu0 0
        %626 = vmatpush1.bf16.msra.mxu0 %v607
        %627 = vmatprep.subr.bf16.mxu0 0
        %628 = vmatpush1.bf16.msra.mxu0 %v608
        %629 = vmatprep.subr.bf16.mxu0 0
        %630 = vmatpush1.bf16.msra.mxu0 %v609
        %631 = vmatprep.subr.bf16.mxu0 0
        %632 = vmatpush1.bf16.msra.mxu0 %v610
        %633 = vmatprep.subr.bf16.mxu0 0
        %634 = vmatpush1.bf16.msra.mxu0 %v611
        %635 = vmatprep.subr.bf16.mxu0 0
        %636 = vmatpush1.bf16.msra.mxu0 %v612
        %637 = vmatprep.subr.bf16.mxu0 0
        %638 = vmatpush1.bf16.msra.mxu0 0
        %639 = vmatprep.subr.bf16.mxu0 0
        %640 = vmatpush1.bf16.msra.mxu0 0
        %641 = vmatprep.subr.bf16.mxu0 0
        %642 = vmatpush1.bf16.msra.mxu0 0
        %643 = vmatprep.subr.bf16.mxu0 0
        %644 = vmatpush1.bf16.msra.mxu0 0
        %645 = vmatprep.subr.bf16.mxu0 0
        %646 = vmatpush1.bf16.msra.mxu0 0
        %647 = vmatprep.subr.bf16.mxu0 0
        %648 = vmatpush1.bf16.msra.mxu0 0
        %649 = vmatprep.subr.bf16.mxu0 0
        %650 = vmatpush1.bf16.msra.mxu0 0
        %651 = vmatprep.subr.bf16.mxu0 0
        %652 = vmatpush1.bf16.msra.mxu0 0
        %653 = vmatprep.subr.bf16.mxu0 0
        %654 = vmatpush1.bf16.msra.mxu0 0
        %655 = vmatprep.mubr.bf16.mxu0 0
        %656 = vmatmul.mubr.bf16.gmra.mrb[0].mxu0 %v621
        %v657 = vpop.f32.mrb[0].mxu0
        %v658 = vadd.f32 0.0, %v657
        %v659 = vpop.f32.mrb[0].mxu0
        %v660 = vpop.f32.mrb[0].mxu0
        %v661 = vpop.f32.mrb[0].mxu0
        %662 = vdwg.mxu0
        %v663 = vld [vmem:[%s4] sm:$0xf]
        %v664 = vld [vmem:[%s4 + $0x4] sm:$0xf]
        %v665 = vld [vmem:[%s4 + $0x8] sm:$0xf]
        %v666 = vld [vmem:[%s4 + $0xc] sm:$0xf]
        %v667 = vld [vmem:[%s4 + $0x10] sm:$0xf]
        %v668 = vld [vmem:[%s4 + $0x14] sm:$0xf]
        %v669 = vld [vmem:[%s4 + $0x18] sm:$0xf]
        %v670 = vld [vmem:[%s4 + $0x1c] sm:$0xf]
        %v671 = vld [vmem:[%s4 + $0x20] sm:$0xf]
        %v672 = vld [vmem:[%s4 + $0x24] sm:$0xf]
        %v673 = vld [vmem:[%s4 + $0x28] sm:$0xf]
        %v674 = vld [vmem:[%s4 + $0x2c] sm:$0xf]
        %v675 = vld [vmem:[%s4 + $0x30] sm:$0xf]
        %v676 = vld [vmem:[%s4 + $0x34] sm:$0xf]
        %v691 = vunpack.c.l.b16 %v663
        %v692 = vunpack.c.l.b16 %v664
        %v693 = vunpack.c.l.b16 %v665
        %v694 = vunpack.c.l.b16 %v666
        %v695 = vunpack.c.l.b16 %v667
        %v696 = vunpack.c.l.b16 %v668
        %v697 = vunpack.c.l.b16 %v669
        %v698 = vunpack.c.l.b16 %v670
        %v699 = vunpack.c.l.b16 %v671
        %v700 = vunpack.c.l.b16 %v672
        %v701 = vunpack.c.l.b16 %v673
        %v702 = vunpack.c.l.b16 %v674
        %v703 = vunpack.c.l.b16 %v675
        %v704 = vunpack.c.l.b16 %v676
        %v705 = vpack.c.b16 %v692, %v691
        %v706 = vpack.c.b16 %v694, %v693
        %v707 = vpack.c.b16 %v696, %v695
        %v708 = vpack.c.b16 %v698, %v697
        %v709 = vpack.c.b16 %v700, %v699
        %v710 = vpack.c.b16 %v702, %v701
        %v711 = vpack.c.b16 %v704, %v703
        %719 = vmatprep.subr.bf16.mxu0 0
        %720 = vmatpush1.bf16.msra.mxu0 %v705
        %721 = vmatprep.subr.bf16.mxu0 0
        %722 = vmatpush1.bf16.msra.mxu0 %v706
        %723 = vmatprep.subr.bf16.mxu0 0
        %724 = vmatpush1.bf16.msra.mxu0 %v707
        %725 = vmatprep.subr.bf16.mxu0 0
        %726 = vmatpush1.bf16.msra.mxu0 %v708
        %727 = vmatprep.subr.bf16.mxu0 0
        %728 = vmatpush1.bf16.msra.mxu0 %v709
        %729 = vmatprep.subr.bf16.mxu0 0
        %730 = vmatpush1.bf16.msra.mxu0 %v710
        %731 = vmatprep.subr.bf16.mxu0 0
        %732 = vmatpush1.bf16.msra.mxu0 %v711
        %733 = vmatprep.subr.bf16.mxu0 0
        %734 = vmatpush1.bf16.msra.mxu0 0
        %735 = vmatprep.subr.bf16.mxu0 0
        %736 = vmatpush1.bf16.msra.mxu0 0
        %737 = vmatprep.subr.bf16.mxu0 0
        %738 = vmatpush1.bf16.msra.mxu0 0
        %739 = vmatprep.subr.bf16.mxu0 0
        %740 = vmatpush1.bf16.msra.mxu0 0
        %741 = vmatprep.subr.bf16.mxu0 0
        %742 = vmatpush1.bf16.msra.mxu0 0
        %743 = vmatprep.subr.bf16.mxu0 0
        %744 = vmatpush1.bf16.msra.mxu0 0
        %745 = vmatprep.subr.bf16.mxu0 0
        %746 = vmatpush1.bf16.msra.mxu0 0
        %747 = vmatprep.subr.bf16.mxu0 0
        %748 = vmatpush1.bf16.msra.mxu0 0
        %749 = vmatprep.subr.bf16.mxu0 0
        %750 = vmatpush1.bf16.msra.mxu0 0
        %751 = vmatprep.mubr.bf16.mxu0 0
        %752 = vmatmul.mubr.bf16.gmra.mrb[0].mxu0 %v621
        %v753 = vpop.f32.mrb[0].mxu0
        %v754 = vadd.f32 0.0, %v753
        %v755 = vpop.f32.mrb[0].mxu0
        %v756 = vpop.f32.mrb[0].mxu0
        %v757 = vpop.f32.mrb[0].mxu0
        %758 = vdwg.mxu0
        %v759 = vmax.f32 %v658, %v754
        %vm760 = vcmask 456704
        %761 = vst.msk [vmem:[#allocation3] sm:$0x7f] %vm760, %v759
        %v762 = vld [vmem:[#allocation3] sm:$0x1f]
        %v763 = vld [vmem:[#allocation3 + $0x1] sm:$0x1f]
        %v764 = vld [vmem:[#allocation3 + $0x2] sm:$0x1f]
        %766 = vrot.lane.b32.xlu0 %v763, 56
        %v767 = vpop.permute.xlu0 %766
        %770 = vrot.lane.b32.xlu0 %v764, 112
        %v771 = vpop.permute.xlu0 %770
        %vm773 = vcmask 457728
        %v774 = vsel %vm773, %v762, %v767
        %v775 = vsel %vm555, %v774, %v771
        %v776 = vpack.c.bf16 %v775, %v775
        %v777 = vpack.c.bf16 %v771, %v771
        %v778 = vld [vmem:[%s5] sm:$0xf]
        %v779 = vld [vmem:[%s5 + $0x4] sm:$0xf]
        %v780 = vld [vmem:[%s5 + $0x8] sm:$0xf]
        %v781 = vld [vmem:[%s5 + $0xc] sm:$0xf]
        %v782 = vld [vmem:[%s5 + $0x10] sm:$0xf]
        %v783 = vld [vmem:[%s5 + $0x14] sm:$0xf]
        %v784 = vld [vmem:[%s5 + $0x18] sm:$0xf]
        %v785 = vld [vmem:[%s5 + $0x1c] sm:$0xf]
        %v786 = vld [vmem:[%s5 + $0x20] sm:$0xf]
        %v787 = vld [vmem:[%s5 + $0x24] sm:$0xf]
        %v788 = vld [vmem:[%s5 + $0x28] sm:$0xf]
        %v789 = vld [vmem:[%s5 + $0x2c] sm:$0xf]
        %v790 = vld [vmem:[%s5 + $0x30] sm:$0xf]
        %v791 = vld [vmem:[%s5 + $0x34] sm:$0xf]
        %v792 = vld [vmem:[%s5 + $0x38] sm:$0xf]
        %v793 = vld [vmem:[%s5 + $0x3c] sm:$0xf]
        %v794 = vld [vmem:[%s5 + $0x40] sm:$0xf]
        %v795 = vld [vmem:[%s5 + $0x44] sm:$0xf]
        %v796 = vld [vmem:[%s5 + $0x48] sm:$0xf]
        %v797 = vld [vmem:[%s5 + $0x4c] sm:$0xf]
        %v798 = vld [vmem:[%s5 + $0x50] sm:$0xf]
        %v799 = vld [vmem:[%s6] sm:$0x1]
        %v801 = vlaneseq
        %v802 = vshrl.u32 %v801, 7
        %v803 = vsub.s32 0, %v802
        %v804 = vrot.slane %v799, %v803
        %v827 = vunpack.c.l.b16 %v778
        %v828 = vunpack.c.l.b16 %v779
        %v829 = vunpack.c.l.b16 %v780
        %v830 = vunpack.c.l.b16 %v781
        %v831 = vunpack.c.l.b16 %v782
        %v832 = vunpack.c.l.b16 %v783
        %v833 = vunpack.c.l.b16 %v784
        %v834 = vunpack.c.l.b16 %v785
        %v835 = vunpack.c.l.b16 %v786
        %v836 = vunpack.c.l.b16 %v787
        %v837 = vunpack.c.l.b16 %v788
        %v838 = vunpack.c.l.b16 %v789
        %v839 = vunpack.c.l.b16 %v790
        %v840 = vunpack.c.l.b16 %v791
        %v841 = vunpack.c.l.b16 %v792
        %v842 = vunpack.c.l.b16 %v793
        %v843 = vunpack.c.l.b16 %v794
        %v844 = vunpack.c.l.b16 %v795
        %v845 = vunpack.c.l.b16 %v796
        %v846 = vunpack.c.l.b16 %v797
        %v847 = vunpack.c.l.b16 %v798
        %v848 = vpack.c.b16 %v828, %v827
        %v849 = vpack.c.b16 %v830, %v829
        %v850 = vpack.c.b16 %v832, %v831
        %v851 = vpack.c.b16 %v834, %v833
        %v852 = vpack.c.b16 %v836, %v835
        %v853 = vpack.c.b16 %v838, %v837
        %v854 = vpack.c.b16 %v840, %v839
        %v855 = vpack.c.b16 %v842, %v841
        %v856 = vpack.c.b16 %v844, %v843
        %v857 = vpack.c.b16 %v846, %v845
        %v858 = vpack.c.b16 %v847, %v847
        %vm869 = vcmask 326656
        %v871 = vsel %vm869, %v777, 0
        %vm873 = vcmask 1043456
        %v875 = vsel %vm873, %v858, 0
        %877 = vmatprep.subr.bf16.mxu0 0
        %878 = vmatpush1.bf16.msra.mxu0 %v848
        %879 = vmatprep.subr.bf16.mxu0 0
        %880 = vmatpush1.bf16.msra.mxu0 %v849
        %881 = vmatprep.subr.bf16.mxu0 0
        %882 = vmatpush1.bf16.msra.mxu0 %v850
        %883 = vmatprep.subr.bf16.mxu0 0
        %884 = vmatpush1.bf16.msra.mxu0 %v851
        %885 = vmatprep.subr.bf16.mxu0 0
        %886 = vmatpush1.bf16.msra.mxu0 %v852
        %887 = vmatprep.subr.bf16.mxu0 0
        %888 = vmatpush1.bf16.msra.mxu0 %v853
        %889 = vmatprep.subr.bf16.mxu0 0
        %890 = vmatpush1.bf16.msra.mxu0 %v854
        %891 = vmatprep.subr.bf16.mxu0 0
        %892 = vmatpush1.bf16.msra.mxu0 %v855
        %893 = vmatprep.subr.bf16.mxu0 0
        %894 = vmatpush1.bf16.msra.mxu0 %v856
        %895 = vmatprep.subr.bf16.mxu0 0
        %896 = vmatpush1.bf16.msra.mxu0 %v857
        %897 = vmatprep.subr.bf16.mxu0 0
        %898 = vmatpush1.bf16.msra.mxu0 %v875
        %899 = vmatprep.subr.bf16.mxu0 0
        %900 = vmatpush1.bf16.msra.mxu0 0
        %901 = vmatprep.subr.bf16.mxu0 0
        %902 = vmatpush1.bf16.msra.mxu0 0
        %903 = vmatprep.subr.bf16.mxu0 0
        %904 = vmatpush1.bf16.msra.mxu0 0
        %905 = vmatprep.subr.bf16.mxu0 0
        %906 = vmatpush1.bf16.msra.mxu0 0
        %907 = vmatprep.subr.bf16.mxu0 0
        %908 = vmatpush1.bf16.msra.mxu0 0
        %909 = vmatprep.mubr.bf16.mxu0 %v871
        %910 = vmatmul.mubr.bf16.gmra.mrb[0].mxu0 %v776
        %v911 = vpop.f32.mrb[0].mxu0
        %v912 = vadd.f32 %v804, %v911
        %v913 = vpop.f32.mrb[0].mxu0
        %v914 = vpop.f32.mrb[0].mxu0
        %v915 = vpop.f32.mrb[0].mxu0
        %916 = vdwg.mxu0
        %v917 = vmax.f32 %v912, 0.0
        %vm918 = vcmask 651264
        %919 = vst.msk [vmem:[#allocation4] sm:$0x1f] %vm918, %v917
        %v920 = vld [vmem:[#allocation4] ss:$2 sm:$0x3]
        %s921 = scalar_lea.vmem [#allocation4], 1
        %v922 = vld [vmem:[%s921] ss:$2 sm:$0x3]
        %v923 = vmax.f32 %v920, %v922
        %v924 = vpack.c.bf16 %v923, %v923
        %v925 = vld [vmem:[%s7] sm:$0xf]
        %v926 = vld [vmem:[%s7 + $0x4] sm:$0xf]
        %v927 = vld [vmem:[%s7 + $0x8] sm:$0xf]
        %v928 = vld [vmem:[%s7 + $0xc] sm:$0xf]
        %v929 = vld [vmem:[%s7 + $0x10] sm:$0xf]
        %v930 = vld [vmem:[%s7 + $0x14] sm:$0xf]
        %v931 = vld [vmem:[%s7 + $0x18] sm:$0xf]
        %v932 = vld [vmem:[%s7 + $0x1c] sm:$0xf]
        %v933 = vld [vmem:[%s7 + $0x20] sm:$0xf]
        %v934 = vld [vmem:[%s7 + $0x24] sm:$0xf]
        %v945 = vunpack.c.l.b16 %v925
        %v946 = vunpack.c.l.b16 %v926
        %v947 = vunpack.c.l.b16 %v927
        %v948 = vunpack.c.l.b16 %v928
        %v949 = vunpack.c.l.b16 %v929
        %v950 = vunpack.c.l.b16 %v930
        %v951 = vunpack.c.l.b16 %v931
        %v952 = vunpack.c.l.b16 %v932
        %v953 = vunpack.c.l.b16 %v933
        %v954 = vunpack.c.l.b16 %v934
        %v955 = vpack.c.b16 %v946, %v945
        %v956 = vpack.c.b16 %v948, %v947
        %v957 = vpack.c.b16 %v950, %v949
        %v958 = vpack.c.b16 %v952, %v951
        %v959 = vpack.c.b16 %v954, %v953
        %vm965 = vcmask 654336
        %v967 = vsel %vm965, %v924, 0
        %969 = vmatprep.subr.bf16.mxu0 0
        %970 = vmatpush1.bf16.msra.mxu0 %v955
        %971 = vmatprep.subr.bf16.mxu0 0
        %972 = vmatpush1.bf16.msra.mxu0 %v956
        %973 = vmatprep.subr.bf16.mxu0 0
        %974 = vmatpush1.bf16.msra.mxu0 %v957
        %975 = vmatprep.subr.bf16.mxu0 0
        %976 = vmatpush1.bf16.msra.mxu0 %v958
        %977 = vmatprep.subr.bf16.mxu0 0
        %978 = vmatpush1.bf16.msra.mxu0 %v959
        %979 = vmatprep.subr.bf16.mxu0 0
        %980 = vmatpush1.bf16.msra.mxu0 0
        %981 = vmatprep.subr.bf16.mxu0 0
        %982 = vmatpush1.bf16.msra.mxu0 0
        %983 = vmatprep.subr.bf16.mxu0 0
        %984 = vmatpush1.bf16.msra.mxu0 0
        %985 = vmatprep.subr.bf16.mxu0 0
        %986 = vmatpush1.bf16.msra.mxu0 0
        %987 = vmatprep.subr.bf16.mxu0 0
        %988 = vmatpush1.bf16.msra.mxu0 0
        %989 = vmatprep.subr.bf16.mxu0 0
        %990 = vmatpush1.bf16.msra.mxu0 0
        %991 = vmatprep.subr.bf16.mxu0 0
        %992 = vmatpush1.bf16.msra.mxu0 0
        %993 = vmatprep.subr.bf16.mxu0 0
        %994 = vmatpush1.bf16.msra.mxu0 0
        %995 = vmatprep.subr.bf16.mxu0 0
        %996 = vmatpush1.bf16.msra.mxu0 0
        %997 = vmatprep.subr.bf16.mxu0 0
        %998 = vmatpush1.bf16.msra.mxu0 0
        %999 = vmatprep.subr.bf16.mxu0 0
        %1000 = vmatpush1.bf16.msra.mxu0 0
        %1001 = vmatprep.mubr.bf16.mxu0 0
        %1002 = vmatmul.mubr.bf16.gmra.mrb[0].mxu0 %v967
        %v1003 = vpop.f32.mrb[0].mxu0
        %v1004 = vadd.f32 0.0, %v1003
        %v1005 = vpop.f32.mrb[0].mxu0
        %v1006 = vpop.f32.mrb[0].mxu0
        %v1007 = vpop.f32.mrb[0].mxu0
        %1008 = vdwg.mxu0
        %v1009 = vld [vmem:[%s8] sm:$0xf]
        %v1010 = vld [vmem:[%s8 + $0x4] sm:$0xf]
        %v1011 = vld [vmem:[%s8 + $0x8] sm:$0xf]
        %v1012 = vld [vmem:[%s8 + $0xc] sm:$0xf]
        %v1013 = vld [vmem:[%s8 + $0x10] sm:$0xf]
        %v1014 = vld [vmem:[%s8 + $0x14] sm:$0xf]
        %v1015 = vld [vmem:[%s8 + $0x18] sm:$0xf]
        %v1016 = vld [vmem:[%s8 + $0x1c] sm:$0xf]
        %v1017 = vld [vmem:[%s8 + $0x20] sm:$0xf]
        %v1018 = vld [vmem:[%s8 + $0x24] sm:$0xf]
        %v1029 = vunpack.c.l.b16 %v1009
        %v1030 = vunpack.c.l.b16 %v1010
        %v1031 = vunpack.c.l.b16 %v1011
        %v1032 = vunpack.c.l.b16 %v1012
        %v1033 = vunpack.c.l.b16 %v1013
        %v1034 = vunpack.c.l.b16 %v1014
        %v1035 = vunpack.c.l.b16 %v1015
        %v1036 = vunpack.c.l.b16 %v1016
        %v1037 = vunpack.c.l.b16 %v1017
        %v1038 = vunpack.c.l.b16 %v1018
        %v1039 = vpack.c.b16 %v1030, %v1029
        %v1040 = vpack.c.b16 %v1032, %v1031
        %v1041 = vpack.c.b16 %v1034, %v1033
        %v1042 = vpack.c.b16 %v1036, %v1035
        %v1043 = vpack.c.b16 %v1038, %v1037
        %1049 = vmatprep.subr.bf16.mxu0 0
        %1050 = vmatpush1.bf16.msra.mxu0 %v1039
        %1051 = vmatprep.subr.bf16.mxu0 0
        %1052 = vmatpush1.bf16.msra.mxu0 %v1040
        %1053 = vmatprep.subr.bf16.mxu0 0
        %1054 = vmatpush1.bf16.msra.mxu0 %v1041
        %1055 = vmatprep.subr.bf16.mxu0 0
        %1056 = vmatpush1.bf16.msra.mxu0 %v1042
        %1057 = vmatprep.subr.bf16.mxu0 0
        %1058 = vmatpush1.bf16.msra.mxu0 %v1043
        %1059 = vmatprep.subr.bf16.mxu0 0
        %1060 = vmatpush1.bf16.msra.mxu0 0
        %1061 = vmatprep.subr.bf16.mxu0 0
        %1062 = vmatpush1.bf16.msra.mxu0 0
        %1063 = vmatprep.subr.bf16.mxu0 0
        %1064 = vmatpush1.bf16.msra.mxu0 0
        %1065 = vmatprep.subr.bf16.mxu0 0
        %1066 = vmatpush1.bf16.msra.mxu0 0
        %1067 = vmatprep.subr.bf16.mxu0 0
        %1068 = vmatpush1.bf16.msra.mxu0 0
        %1069 = vmatprep.subr.bf16.mxu0 0
        %1070 = vmatpush1.bf16.msra.mxu0 0
        %1071 = vmatprep.subr.bf16.mxu0 0
        %1072 = vmatpush1.bf16.msra.mxu0 0
        %1073 = vmatprep.subr.bf16.mxu0 0
        %1074 = vmatpush1.bf16.msra.mxu0 0
        %1075 = vmatprep.subr.bf16.mxu0 0
        %1076 = vmatpush1.bf16.msra.mxu0 0
        %1077 = vmatprep.subr.bf16.mxu0 0
        %1078 = vmatpush1.bf16.msra.mxu0 0
        %1079 = vmatprep.subr.bf16.mxu0 0
        %1080 = vmatpush1.bf16.msra.mxu0 0
        %1081 = vmatprep.mubr.bf16.mxu0 0
        %1082 = vmatmul.mubr.bf16.gmra.mrb[0].mxu0 %v967
        %v1083 = vpop.f32.mrb[0].mxu0
        %v1084 = vadd.f32 0.0, %v1083
        %v1085 = vpop.f32.mrb[0].mxu0
        %v1086 = vpop.f32.mrb[0].mxu0
        %v1087 = vpop.f32.mrb[0].mxu0
        %1088 = vdwg.mxu0
        %v1089 = vmax.f32 %v1004, %v1084
        %vm1090 = vcmask 254976
        %1091 = vst.msk [vmem:[#allocation5] sm:$0x3] %vm1090, %v1089
        %v1092 = vld [vmem:[#allocation5] sm:$0x1]
        %v1093 = vld [vmem:[#allocation5 + $0x1] sm:$0x1]
        %1095 = vrot.lane.b32.xlu0 %v1093, 32
        %v1096 = vpop.permute.xlu0 %1095
        %vm1098 = vcmask 261120
        %v1099 = vsel %vm1098, %v1092, %v1096
        %v1100 = vpack.c.bf16 %v1099, %v1099
        %v1101 = vld [vmem:[%s9] sm:$0xf]
        %v1102 = vld [vmem:[%s9 + $0x4] sm:$0xf]
        %v1103 = vld [vmem:[%s9 + $0x8] sm:$0xf]
        %v1104 = vld [vmem:[%s9 + $0xc] sm:$0xf]
        %v1105 = vld [vmem:[%s9 + $0x10] sm:$0xf]
        %v1106 = vld [vmem:[%s9 + $0x14] sm:$0xf]
        %v1107 = vld [vmem:[%s9 + $0x18] sm:$0xf]
        %v1108 = vld [vmem:[%s9 + $0x1c] sm:$0xf]
        %v1109 = vld [vmem:[%s10] sm:$0x1]
        %v1118 = vunpack.c.l.b16 %v1101
        %v1119 = vunpack.c.l.b16 %v1102
        %v1120 = vunpack.c.l.b16 %v1103
        %v1121 = vunpack.c.l.b16 %v1104
        %v1122 = vunpack.c.l.b16 %v1105
        %v1123 = vunpack.c.l.b16 %v1106
        %v1124 = vunpack.c.l.b16 %v1107
        %v1125 = vunpack.c.l.b16 %v1108
        %v1126 = vpack.c.b16 %v1119, %v1118
        %v1127 = vpack.c.b16 %v1121, %v1120
        %v1128 = vpack.c.b16 %v1123, %v1122
        %v1129 = vpack.c.b16 %v1125, %v1124
        %v1135 = vsel %vm401, %v1100, 0
        %1137 = vmatprep.subr.bf16.mxu0 0
        %1138 = vmatpush1.bf16.msra.mxu0 %v1126
        %1139 = vmatprep.subr.bf16.mxu0 0
        %1140 = vmatpush1.bf16.msra.mxu0 %v1127
        %1141 = vmatprep.subr.bf16.mxu0 0
        %1142 = vmatpush1.bf16.msra.mxu0 %v1128
        %1143 = vmatprep.subr.bf16.mxu0 0
        %1144 = vmatpush1.bf16.msra.mxu0 %v1129
        %1145 = vmatprep.subr.bf16.mxu0 0
        %1146 = vmatpush1.bf16.msra.mxu0 0
        %1147 = vmatprep.subr.bf16.mxu0 0
        %1148 = vmatpush1.bf16.msra.mxu0 0
        %1149 = vmatprep.subr.bf16.mxu0 0
        %1150 = vmatpush1.bf16.msra.mxu0 0
        %1151 = vmatprep.subr.bf16.mxu0 0
        %1152 = vmatpush1.bf16.msra.mxu0 0
        %1153 = vmatprep.subr.bf16.mxu0 0
        %1154 = vmatpush1.bf16.msra.mxu0 0
        %1155 = vmatprep.subr.bf16.mxu0 0
        %1156 = vmatpush1.bf16.msra.mxu0 0
        %1157 = vmatprep.subr.bf16.mxu0 0
        %1158 = vmatpush1.bf16.msra.mxu0 0
        %1159 = vmatprep.subr.bf16.mxu0 0
        %1160 = vmatpush1.bf16.msra.mxu0 0
        %1161 = vmatprep.subr.bf16.mxu0 0
        %1162 = vmatpush1.bf16.msra.mxu0 0
        %1163 = vmatprep.subr.bf16.mxu0 0
        %1164 = vmatpush1.bf16.msra.mxu0 0
        %1165 = vmatprep.subr.bf16.mxu0 0
        %1166 = vmatpush1.bf16.msra.mxu0 0
        %1167 = vmatprep.subr.bf16.mxu0 0
        %1168 = vmatpush1.bf16.msra.mxu0 0
        %1169 = vmatprep.mubr.bf16.mxu0 0
        %1170 = vmatmul.mubr.bf16.gmra.mrb[0].mxu0 %v1135
        %v1171 = vpop.f32.mrb[0].mxu0
        %v1172 = vadd.f32 %v1109, %v1171
        %v1173 = vpop.f32.mrb[0].mxu0
        %v1174 = vpop.f32.mrb[0].mxu0
        %v1175 = vpop.f32.mrb[0].mxu0
        %1176 = vdwg.mxu0
        %vm1177 = vcmask 32768
        %1178 = vst.msk [vmem:[%s379] sm:$0x1] %vm1177, %v1172
        %s1179 = sand.u32 %s269, 1
        %s1180 = scalar_lea.sflag [#allocation7], %s1179
        %s1181 = sand.u32 %s269, 1
        %s1182 = scalar_lea.vmem [#allocation6], %s1181
        // Predicated region
        $region65: #{_lambda_.1} parent=63 // pred_check
          %p1183 = pneg %p279
        $region66: #{_lambda_.1} parent=63 // pred_check_branch
          %1185 = sbr.rel (%p1183) target = $region68
        $region67: #{_lambda_.1} parent=63 // pred_region
          %s1187 = ssub.s32 16, 16
          %1188 = vsyncadd %s1180, %s1187
          %s1189 = smul.addr %s25, 16
          %s1190 = scalar_lea.hbm %s11, %s1189
          %s1192 = sshll.u32 %s1182, 4
          %s1193 = int_to_ptr.vmem [resolvable:$true] %s1192
          %1195 = dma.vmem_to_hbm [thread:$0]  %s1193, 16, %s1190, %s1180
        $region68: #{_lambda_.1} parent=63 // pred_fallthru
          _
      $region64: #{_lambda_.1} parent=5 // pred_fallthru
        _
      %p1196 = scmp.le.s32.totalorder 2, %s20
      // Predicated region
      $region69: #{_lambda_.1} parent=5 // pred_check
        %p1197 = pneg %p1196
      $region70: #{_lambda_.1} parent=5 // pred_check_branch
        %1199 = sbr.rel (%p1197) target = $region72
      $region71: #{_lambda_.1} parent=5 // pred_region
        %s1200 = ssub.s32 %s20, 2
        // Predicated region
        $region73: #{_lambda_.1} parent=71 // pred_check
          %p1201 = pneg %p285
        $region74: #{_lambda_.1} parent=71 // pred_check_branch
          %1203 = sbr.rel (%p1201) target = $region76
        $region75: #{_lambda_.1} parent=71 // pred_region
          %s1204 = sand.u32 %s270, 1
          %s1205 = scalar_lea.sflag [#allocation7], %s1204
          %s1206 = sand.u32 %s270, 1
          %s1207 = scalar_lea.vmem [#allocation6], %s1206
          %1208 = dma.done %s1205, 16
        $region76: #{_lambda_.1} parent=71 // pred_fallthru
          _
      $region72: #{_lambda_.1} parent=5 // pred_fallthru
        _
    $region6: #{_lambda_.1} parent=1 // loop_footer
      %s24 = sadd.s32 1, %s20
    $region7: #{_lambda_.1} parent=1 // loop_footer_branch
      %19 = sbr.rel target = $region3
    $region8: #{_lambda_.1} parent=1 // loop_exit
      _
    %1209 = vsyncpa [#allocation7], 1
    %s1210 = scalar_lea.sflag [#allocation7], 1
    %1211 = vsyncpa %s1210, 1

</llo_original>
